<compile_context>
chip_gen: v6e
topology: v6e:2x2x1
jax: 0.10.0
libtpu: 0.0.40
codegen_flags: <defaults>
</compile_context>

<pallas_src>
import functools

import jax
import jax.numpy as jnp
from jax.experimental import pallas as pl
from jax.experimental.pallas import tpu as pltpu


def _dyrelu_kernel(x_ref, pool_ref, w1t_ref, b1_ref, w2t_ref, b2_ref, o_ref, *,
                   bt, out_channels):
    oc = out_channels

    # ---- AdaptiveAvgPool2d(1): per-batch spatial mean via MXU matmul --------
    # pool_ref is a (HW, 1) column of 1/HW, DMA'd once (constant index_map),
    # so no per-step ones materialization and no separate inv_hw multiply.
    # The Bt pooling matmuls are independent (pipeline in the MXU).
    pool_col = pool_ref[...]                                        # (HW, 1) f32
    cols = [jnp.dot(x_ref[i].astype(jnp.float32), pool_col,
                    preferred_element_type=jnp.float32)             # (C, 1)
            for i in range(bt)]
    pooled = cols[0] if bt == 1 else jnp.concatenate(cols, axis=1)  # (C, Bt)

    # ---- fc in column form: ONE matmul per layer for all Bt batches ---------
    h = jnp.dot(w1t_ref[...], pooled,
                preferred_element_type=jnp.float32) + b1_ref[...]   # (hidden, Bt)
    h = jnp.maximum(h, 0.0)                                         # ReLU
    y = jnp.dot(w2t_ref[...], h,
                preferred_element_type=jnp.float32) + b2_ref[...]   # (4*oc, Bt)
    y = jnp.clip((y + 3.0) * (1.0 / 6.0), 0.0, 1.0)                 # hardsigmoid

    # ---- coefficients, already column-major (oc, Bt): no relayouts ----------
    a1 = (y[0 * oc:1 * oc] - 0.5) * 2.0 + 1.0
    bb1 = y[1 * oc:2 * oc] - 0.5
    a2 = (y[2 * oc:3 * oc] - 0.5) * 2.0
    bb2 = y[3 * oc:4 * oc] - 0.5

    # ---- elementwise hot path: max of the two affine branches ---------------
    # (oc, 1) coefficient columns lane-broadcast against the (C, HW) slab.
    for i in range(bt):
        x_i = x_ref[i]                                              # (C, HW)
        o_ref[i] = jnp.maximum(
            x_i * a1[:, i:i + 1] + bb1[:, i:i + 1],
            x_i * a2[:, i:i + 1] + bb2[:, i:i + 1]).astype(o_ref.dtype)


def dyrelu_pallas(x_nchw, w1, b1, w2, b2, out_channels):
    """x_nchw: (B, C, H, W). Returns (B, out_channels, H, W) in x's dtype."""
    B, C, H, W = x_nchw.shape
    # The broadcast x * a1 requires out_channels == C (same constraint as the
    # PyTorch reference usage).
    assert out_channels == C, "DyReLU requires out_channels == in_channels"
    hidden = w1.shape[1]
    oc = out_channels
    HW = H * W

    # No lane padding: block last dim == full HW extent (exemption), so a
    # non-128-multiple HW ends in a masked tail vst instead of an extra
    # pad + slice HBM round trip.
    x = x_nchw.reshape(B, C, HW)

    # One-time parameter prep (tiny, plain XLA): column/sublane-major weights
    # plus the pooling column with 1/HW folded in.
    pool_col = jnp.full((HW, 1), 1.0 / float(HW), dtype=jnp.float32)
    w1t = jnp.transpose(w1).astype(jnp.float32)            # (hidden, C)
    w2t = jnp.transpose(w2).astype(jnp.float32)            # (4*oc, hidden)
    b1c = b1.reshape(hidden, 1).astype(jnp.float32)        # (hidden, 1)
    b2c = b2.reshape(4 * oc, 1).astype(jnp.float32)        # (4*oc, 1)

    # ---- choose batches-per-step (Bt) from the per-generation VMEM budget ---
    try:   # v5e/v6e: 128 MiB, v7x: 64 MiB
        vmem_cap = int(getattr(pltpu.get_tpu_info(), "vmem_capacity_bytes",
                               64 << 20))
    except Exception:
        vmem_cap = 64 << 20
    itemsize = jnp.dtype(x.dtype).itemsize
    per_batch = 2 * (C + oc) * HW * itemsize          # double-buffered in + out
    budget = max(min(vmem_cap - (16 << 20), 96 << 20), 8 << 20)
    bt_fit = max(int(budget // per_batch), 1)
    # TODO(synk): if even a single (C, HW) slab overflows VMEM (e.g. C=64 at
    # 224x224 on v7x), switch to a two-phase scheme (pool over HW tiles, then
    # stream HW tiles for the broadcasted max) instead of clamping Bt to 1.
    # Keep >=2 grid steps when B >= 2 so both v7x TensorCores get work; within
    # that, fold as many batches per step as fit to amortize the per-step
    # overhead and the coefficient-MLP prologue (also batches fc1/fc2).
    bt_target = pl.cdiv(B, 2) if B >= 2 else 1
    bt_cap = max(1, min(bt_fit, bt_target, B))
    bt = max(d for d in range(1, bt_cap + 1) if B % d == 0)
    num_steps = B // bt

    kernel = functools.partial(_dyrelu_kernel, bt=bt, out_channels=oc)

    param_bytes = 2 * 4 * (pool_col.size + w1t.size + b1c.size +
                           w2t.size + b2c.size)
    vmem_limit = int(min(max(bt * per_batch + param_bytes + (4 << 20),
                             32 << 20), 100 << 20))

    out = pl.pallas_call(
        kernel,
        out_shape=jax.ShapeDtypeStruct((B, oc, HW), x.dtype),
        grid_spec=pltpu.PrefetchScalarGridSpec(
            num_scalar_prefetch=0,
            grid=(num_steps,),
            in_specs=[
                # batch tile of Bt elements; kernel sees (Bt, C, HW)
                pl.BlockSpec((bt, C, HW), lambda t: (t, 0, 0)),
                # constant index_map params: DMA'd once, never re-fetched
                pl.BlockSpec((HW, 1), lambda t: (0, 0)),
                pl.BlockSpec((hidden, C), lambda t: (0, 0)),
                pl.BlockSpec((hidden, 1), lambda t: (0, 0)),
                pl.BlockSpec((4 * oc, hidden), lambda t: (0, 0)),
                pl.BlockSpec((4 * oc, 1), lambda t: (0, 0)),
            ],
            out_specs=pl.BlockSpec((bt, oc, HW), lambda t: (t, 0, 0)),
        ),
        compiler_params=pltpu.CompilerParams(
            dimension_semantics=("parallel",),
            vmem_limit_bytes=vmem_limit),
    )(x, pool_col, w1t, b1c, w2t, b2c)

    return out.reshape(B, oc, H, W)


def dyrelu_ref(x, w1, b1, w2, b2, out_channels):
    """Pure-JAX reference matching the PyTorch forward exactly."""
    pooled = x.mean(axis=(2, 3))                               # (B, C)
    h = jnp.maximum(pooled @ w1 + b1, 0.0)
    y = h @ w2 + b2
    y = jnp.clip((y + 3.0) / 6.0, 0.0, 1.0)                    # hardsigmoid
    a1, bb1, a2, bb2 = jnp.split(y, 4, axis=1)
    a1 = ((a1 - 0.5) * 2.0 + 1.0)[:, :, None, None]
    a2 = ((a2 - 0.5) * 2.0)[:, :, None, None]
    bb1 = (bb1 - 0.5)[:, :, None, None]
    bb2 = (bb2 - 0.5)[:, :, None, None]
    return jnp.maximum(x * a1 + bb1, x * a2 + bb2)


if __name__ == "__main__":
    # DyReLU(in_channels=16, out_channels=16, expand_ratio=4)
    B, C, H, W = 2, 16, 16, 16
    out_channels = 16
    expand_ratio = 4
    hidden = C // expand_ratio

    key = jax.random.PRNGKey(0)
    kx, k1, k2, k3, k4 = jax.random.split(key, 5)

    x = jax.random.normal(kx, (B, C, H, W), dtype=jnp.float32)
    # synthetic fc params: Linear(C, hidden) -> ReLU -> Linear(hidden, 4*oc)
    # -> Hardsigmoid, applied as pooled @ w1 + b1, h @ w2 + b2
    w1 = jax.random.normal(k1, (C, hidden), dtype=jnp.float32) * 0.2
    b1 = jax.random.normal(k2, (hidden,), dtype=jnp.float32) * 0.1
    w2 = jax.random.normal(k3, (hidden, 4 * out_channels), dtype=jnp.float32) * 0.2
    b2 = jax.random.normal(k4, (4 * out_channels,), dtype=jnp.float32) * 0.1

    out = dyrelu_pallas(x, w1, b1, w2, b2, out_channels)
    out = jax.block_until_ready(out)

    ref = dyrelu_ref(x, w1, b1, w2, b2, out_channels)
    assert out.shape == (B, out_channels, H, W)
    assert jnp.allclose(out, ref, atol=1e-5, rtol=1e-5), "mismatch vs reference"

    print("KERNEL_OK")
</pallas_src>

<mosaic_0001>
module attributes {stable_mosaic.version = 11 : i64} {
  func.func @_dyrelu_kernel(%arg0: i32, %arg1: memref<1x16x256xf32, #tpu.memory_space<vmem>>, %arg2: memref<256x1xf32, #tpu.memory_space<vmem>>, %arg3: memref<4x16xf32, #tpu.memory_space<vmem>>, %arg4: memref<4x1xf32, #tpu.memory_space<vmem>>, %arg5: memref<64x4xf32, #tpu.memory_space<vmem>>, %arg6: memref<64x1xf32, #tpu.memory_space<vmem>>, %arg7: memref<1x16x256xf32, #tpu.memory_space<vmem>>) attributes {dimension_semantics = [#tpu.dimension_semantics<parallel>], iteration_bounds = array<i64: 2>, scalar_prefetch = 0 : i64, scratch_operands = 0 : i64, tpu.core_type = #tpu.core_type<tc>, window_params = [{transform_indices = @transform_0, window_bounds = array<i64: 1, 16, 256>}, {pipeline_mode = #tpu.pipeline_mode<synchronous>, transform_indices = @transform_1, window_bounds = array<i64: 256, 1>}, {pipeline_mode = #tpu.pipeline_mode<synchronous>, transform_indices = @transform_2, window_bounds = array<i64: 4, 16>}, {pipeline_mode = #tpu.pipeline_mode<synchronous>, transform_indices = @transform_3, window_bounds = array<i64: 4, 1>}, {pipeline_mode = #tpu.pipeline_mode<synchronous>, transform_indices = @transform_4, window_bounds = array<i64: 64, 4>}, {pipeline_mode = #tpu.pipeline_mode<synchronous>, transform_indices = @transform_5, window_bounds = array<i64: 64, 1>}, {transform_indices = @transform_6, window_bounds = array<i64: 1, 16, 256>}]} {
    %c0 = arith.constant 0 : index
    %c0_0 = arith.constant 0 : index
    %0 = vector.load %arg2[%c0, %c0_0] : memref<256x1xf32, #tpu.memory_space<vmem>>, vector<256x1xf32>
    %c0_1 = arith.constant 0 : index
    %c0_2 = arith.constant 0 : index
    %c0_3 = arith.constant 0 : index
    %1 = vector.load %arg1[%c0_1, %c0_2, %c0_3] : memref<1x16x256xf32, #tpu.memory_space<vmem>>, vector<1x16x256xf32>
    %2 = vector.shape_cast %1 : vector<1x16x256xf32> to vector<16x256xf32>
    %cst = arith.constant dense<0.000000e+00> : vector<16x1xf32>
    %3 = tpu.matmul %2, %0, %cst {dimension_numbers = #tpu.dot_dimension_numbers<[1], [0], [0], [1], [0, 0, 1, 1], [], []>} : vector<16x256xf32>, vector<256x1xf32>, vector<16x1xf32> -> vector<16x1xf32>
    %c0_4 = arith.constant 0 : index
    %c0_5 = arith.constant 0 : index
    %4 = vector.load %arg3[%c0_4, %c0_5] : memref<4x16xf32, #tpu.memory_space<vmem>>, vector<4x16xf32>
    %cst_6 = arith.constant dense<0.000000e+00> : vector<4x1xf32>
    %5 = tpu.matmul %4, %3, %cst_6 {dimension_numbers = #tpu.dot_dimension_numbers<[1], [0], [0], [1], [0, 0, 1, 1], [], []>} : vector<4x16xf32>, vector<16x1xf32>, vector<4x1xf32> -> vector<4x1xf32>
    %c0_7 = arith.constant 0 : index
    %c0_8 = arith.constant 0 : index
    %6 = vector.load %arg4[%c0_7, %c0_8] : memref<4x1xf32, #tpu.memory_space<vmem>>, vector<4x1xf32>
    %7 = arith.addf %5, %6 : vector<4x1xf32>
    %cst_9 = arith.constant 0.000000e+00 : f32
    %8 = vector.broadcast %cst_9 : f32 to vector<4x1xf32>
    %9 = arith.maximumf %7, %8 : vector<4x1xf32>
    %c0_10 = arith.constant 0 : index
    %c0_11 = arith.constant 0 : index
    %10 = vector.load %arg5[%c0_10, %c0_11] : memref<64x4xf32, #tpu.memory_space<vmem>>, vector<64x4xf32>
    %cst_12 = arith.constant dense<0.000000e+00> : vector<64x1xf32>
    %11 = tpu.matmul %10, %9, %cst_12 {dimension_numbers = #tpu.dot_dimension_numbers<[1], [0], [0], [1], [0, 0, 1, 1], [], []>} : vector<64x4xf32>, vector<4x1xf32>, vector<64x1xf32> -> vector<64x1xf32>
    %c0_13 = arith.constant 0 : index
    %c0_14 = arith.constant 0 : index
    %12 = vector.load %arg6[%c0_13, %c0_14] : memref<64x1xf32, #tpu.memory_space<vmem>>, vector<64x1xf32>
    %13 = arith.addf %11, %12 : vector<64x1xf32>
    %cst_15 = arith.constant 3.000000e+00 : f32
    %14 = vector.broadcast %cst_15 : f32 to vector<64x1xf32>
    %15 = arith.addf %13, %14 : vector<64x1xf32>
    %cst_16 = arith.constant 0.166666672 : f32
    %16 = vector.broadcast %cst_16 : f32 to vector<64x1xf32>
    %17 = arith.mulf %15, %16 : vector<64x1xf32>
    %cst_17 = arith.constant 0.000000e+00 : f32
    %cst_18 = arith.constant 1.000000e+00 : f32
    %18 = vector.broadcast %cst_17 : f32 to vector<64x1xf32>
    %19 = arith.maximumf %18, %17 : vector<64x1xf32>
    %20 = vector.broadcast %cst_18 : f32 to vector<64x1xf32>
    %21 = arith.minimumf %20, %19 : vector<64x1xf32>
    %22 = vector.extract_strided_slice %21 {offsets = [0, 0], sizes = [16, 1], strides = [1, 1]} : vector<64x1xf32> to vector<16x1xf32>
    %cst_19 = arith.constant 5.000000e-01 : f32
    %23 = vector.broadcast %cst_19 : f32 to vector<16x1xf32>
    %24 = arith.subf %22, %23 : vector<16x1xf32>
    %cst_20 = arith.constant 2.000000e+00 : f32
    %25 = vector.broadcast %cst_20 : f32 to vector<16x1xf32>
    %26 = arith.mulf %24, %25 : vector<16x1xf32>
    %cst_21 = arith.constant 1.000000e+00 : f32
    %27 = vector.broadcast %cst_21 : f32 to vector<16x1xf32>
    %28 = arith.addf %26, %27 : vector<16x1xf32>
    %29 = vector.extract_strided_slice %21 {offsets = [16, 0], sizes = [16, 1], strides = [1, 1]} : vector<64x1xf32> to vector<16x1xf32>
    %cst_22 = arith.constant 5.000000e-01 : f32
    %30 = vector.broadcast %cst_22 : f32 to vector<16x1xf32>
    %31 = arith.subf %29, %30 : vector<16x1xf32>
    %32 = vector.extract_strided_slice %21 {offsets = [32, 0], sizes = [16, 1], strides = [1, 1]} : vector<64x1xf32> to vector<16x1xf32>
    %cst_23 = arith.constant 5.000000e-01 : f32
    %33 = vector.broadcast %cst_23 : f32 to vector<16x1xf32>
    %34 = arith.subf %32, %33 : vector<16x1xf32>
    %cst_24 = arith.constant 2.000000e+00 : f32
    %35 = vector.broadcast %cst_24 : f32 to vector<16x1xf32>
    %36 = arith.mulf %34, %35 : vector<16x1xf32>
    %37 = vector.extract_strided_slice %21 {offsets = [48, 0], sizes = [16, 1], strides = [1, 1]} : vector<64x1xf32> to vector<16x1xf32>
    %cst_25 = arith.constant 5.000000e-01 : f32
    %38 = vector.broadcast %cst_25 : f32 to vector<16x1xf32>
    %39 = arith.subf %37, %38 : vector<16x1xf32>
    %c0_26 = arith.constant 0 : index
    %c0_27 = arith.constant 0 : index
    %c0_28 = arith.constant 0 : index
    %40 = vector.load %arg1[%c0_26, %c0_27, %c0_28] : memref<1x16x256xf32, #tpu.memory_space<vmem>>, vector<1x16x256xf32>
    %41 = vector.shape_cast %40 : vector<1x16x256xf32> to vector<16x256xf32>
    %42 = vector.broadcast %28 : vector<16x1xf32> to vector<16x256xf32>
    %43 = arith.mulf %41, %42 : vector<16x256xf32>
    %44 = vector.broadcast %31 : vector<16x1xf32> to vector<16x256xf32>
    %45 = arith.addf %43, %44 : vector<16x256xf32>
    %46 = vector.broadcast %36 : vector<16x1xf32> to vector<16x256xf32>
    %47 = arith.mulf %41, %46 : vector<16x256xf32>
    %48 = vector.broadcast %39 : vector<16x1xf32> to vector<16x256xf32>
    %49 = arith.addf %47, %48 : vector<16x256xf32>
    %50 = arith.maximumf %45, %49 : vector<16x256xf32>
    %c0_29 = arith.constant 0 : index
    %c0_30 = arith.constant 0 : index
    %c0_31 = arith.constant 0 : index
    %51 = vector.load %arg7[%c0_29, %c0_30, %c0_31] : memref<1x16x256xf32, #tpu.memory_space<vmem>>, vector<1x16x256xf32>
    %52 = vector.shape_cast %51 : vector<1x16x256xf32> to vector<16x256xf32>
    %53 = vector.shape_cast %50 : vector<16x256xf32> to vector<1x16x256xf32>
    tpu.vector_store %arg7[%c0_29, %c0_30, %c0_31], %53 {strides = array<i32>} : memref<1x16x256xf32, #tpu.memory_space<vmem>>, vector<1x16x256xf32>,
    return
  }
  func.func @transform_0(%arg0: i32) -> (i32, i32, i32) {
    %c0_i32 = arith.constant 0 : i32
    %c0_i32_0 = arith.constant 0 : i32
    %c0_i32_1 = arith.constant 0 : i32
    return %arg0, %c0_i32, %c0_i32_0 : i32, i32, i32
  }
  func.func @transform_1(%arg0: i32) -> (i32, i32) {
    %c0_i32 = arith.constant 0 : i32
    %c0_i32_0 = arith.constant 0 : i32
    %c0_i32_1 = arith.constant 0 : i32
    return %c0_i32, %c0_i32_0 : i32, i32
  }
  func.func @transform_2(%arg0: i32) -> (i32, i32) {
    %c0_i32 = arith.constant 0 : i32
    %c0_i32_0 = arith.constant 0 : i32
    %c0_i32_1 = arith.constant 0 : i32
    return %c0_i32, %c0_i32_0 : i32, i32
  }
  func.func @transform_3(%arg0: i32) -> (i32, i32) {
    %c0_i32 = arith.constant 0 : i32
    %c0_i32_0 = arith.constant 0 : i32
    %c0_i32_1 = arith.constant 0 : i32
    return %c0_i32, %c0_i32_0 : i32, i32
  }
  func.func @transform_4(%arg0: i32) -> (i32, i32) {
    %c0_i32 = arith.constant 0 : i32
    %c0_i32_0 = arith.constant 0 : i32
    %c0_i32_1 = arith.constant 0 : i32
    return %c0_i32, %c0_i32_0 : i32, i32
  }
  func.func @transform_5(%arg0: i32) -> (i32, i32) {
    %c0_i32 = arith.constant 0 : i32
    %c0_i32_0 = arith.constant 0 : i32
    %c0_i32_1 = arith.constant 0 : i32
    return %c0_i32, %c0_i32_0 : i32, i32
  }
  func.func @transform_6(%arg0: i32) -> (i32, i32, i32) {
    %c0_i32 = arith.constant 0 : i32
    %c0_i32_0 = arith.constant 0 : i32
    %c0_i32_1 = arith.constant 0 : i32
    return %arg0, %c0_i32, %c0_i32_0 : i32, i32, i32
  }
}

</mosaic_0001>

<llo_original>
// kernel: tpu_custom_call.1
$region0: #{tpu_custom_call.1}
  #allocation0 [shape = 'u32[]', space=smem, size = 0x4, offset = 0x4, fixed_abs, tag = 'smem constant byte address 0x4 - core index']
  #allocation1 [shape = 'u32[144,128]{1,0:T(1,128)}', space=vmem, size = 0x12000, scoped, tag = 'internal scratch']
  %s0 = inlined_call_operand.vmem [shape: f32[2,16,256], index: 0, kind: input, shape index: {}]
  %s1 = inlined_call_operand.vmem [shape: f32[256,1], index: 1, kind: input, shape index: {}]
  %s2 = inlined_call_operand.vmem [shape: f32[4,16], index: 2, kind: input, shape index: {}]
  %s3 = inlined_call_operand.vmem [shape: f32[4,1], index: 3, kind: input, shape index: {}]
  %s4 = inlined_call_operand.vmem [shape: f32[64,4], index: 4, kind: input, shape index: {}]
  %s5 = inlined_call_operand.vmem [shape: f32[64,1], index: 5, kind: input, shape index: {}]
  %s6 = inlined_call_operand.hbm [shape: f32[2,16,256], index: 6, kind: output, shape index: {}]
  %s7 = sld [smem:[#allocation0]]
  $region57: #{tpu_custom_call.1} parent=0
    _
  %s9 = ssub.s32 1, %s7
  %s10 = scalar_select 0, %s9, %s7
  $region1: #{tpu_custom_call.1} parent=0
    #allocation2 [shape = 'u8[32768]{0}', space=vmem, size = 0x8000, scoped, tag = 'output window, operand 0']
    #allocation3 [shape = 's32[2]{0}', space=sflag, size = 0x8, scoped, tag = 'scoped memory for tpu_custom_call.1']
    %11 = vsyncpa [#allocation3], 0
    %s12 = scalar_lea.sflag [#allocation3], 1
    %13 = vsyncpa %s12, 0
    loop: start=0, step=1, limit=4
    $region2: #{tpu_custom_call.1} parent=1 // loop_pre_header
      _
    $region3: #{tpu_custom_call.1} parent=1 // loop_header
      %s15 = sphi 0, %s19
      %p16 = scmp.ge.s32.totalorder %s15, 4
      %s25 = sphi 0, %s27
      %s28 = sphi 0, %s25
      %s29 = sphi 0, %s28
      %s45 = sphi 0, %s29
      %s49 = sphi 0, %s49
      %s51 = sphi 0, %s49
      %s52 = sphi 0, %s51
      %s66 = sphi 0, %s52
      %s70 = sphi 0, %s70
      %s72 = sphi 0, %s70
      %s73 = sphi 0, %s72
      %s87 = sphi 0, %s73
      %s91 = sphi 0, %s91
      %s93 = sphi 0, %s91
      %s94 = sphi 0, %s93
      %s108 = sphi 0, %s94
      %s112 = sphi 0, %s112
      %s114 = sphi 0, %s112
      %s115 = sphi 0, %s114
      %s129 = sphi 0, %s115
      %s133 = sphi 0, %s133
      %s135 = sphi 0, %s133
      %s136 = sphi 0, %s135
      %s150 = sphi 0, %s136
      %s156 = sphi 0, %s158
      %s159 = sphi 0, %s156
      %s160 = sphi 0, %s159
      %s176 = sphi 0, %s160
    $region4: #{tpu_custom_call.1} parent=1 // loop_header_branch
      %18 = sbr.rel (%p16) target = $region8
    $region5: #{tpu_custom_call.1} parent=1 // loop_body
      %s20 = ssub.s32 %s15, 1
      %s21 = ssub.s32 %s15, 2
      %s22 = sadd.s32 %s15, 1
      %s23 = ssub.s32 %s15, %s22
      %p24 = scmp.eq.s32.totalorder %s23, 0
      %s26 = sadd.s32 %s25, 1
      %s27 = scalar_select %p24, %s25, %s26
      %p30 = pneg %p24
      %p31 = scmp.eq.s32.totalorder %s15, 1
      %p32 = por %p30, %p31
      %p33 = scmp.ne.s32.totalorder %s25, %s28
      %p34 = scmp.eq.s32.totalorder %s15, 0
      %p35 = por %p33, %p34
      %p36 = scmp.ne.s32.totalorder %s25, %s28
      %p37 = scmp.eq.s32.totalorder %s20, 1
      %p38 = por %p36, %p37
      %p39 = scmp.ne.s32.totalorder %s28, %s29
      %p40 = scmp.eq.s32.totalorder %s20, 0
      %p41 = por %p39, %p40
      %p42 = scmp.ne.s32.totalorder %s28, %s29
      %p43 = scmp.eq.s32.totalorder %s21, 1
      %p44 = por %p42, %p43
      %p46 = scmp.ne.s32.totalorder %s29, %s45
      %p47 = scmp.eq.s32.totalorder %s21, 0
      %p48 = por %p46, %p47
      %s50 = sadd.s32 %s49, 1
      %p53 = scmp.eq.s32.totalorder %s15, 1
      %p54 = scmp.ne.s32.totalorder %s49, %s51
      %p55 = scmp.eq.s32.totalorder %s15, 0
      %p56 = por %p54, %p55
      %p57 = scmp.ne.s32.totalorder %s49, %s51
      %p58 = scmp.eq.s32.totalorder %s20, 1
      %p59 = por %p57, %p58
      %p60 = scmp.ne.s32.totalorder %s51, %s52
      %p61 = scmp.eq.s32.totalorder %s20, 0
      %p62 = por %p60, %p61
      %p63 = scmp.ne.s32.totalorder %s51, %s52
      %p64 = scmp.eq.s32.totalorder %s21, 1
      %p65 = por %p63, %p64
      %p67 = scmp.ne.s32.totalorder %s52, %s66
      %p68 = scmp.eq.s32.totalorder %s21, 0
      %p69 = por %p67, %p68
      %s71 = sadd.s32 %s70, 1
      %p74 = scmp.eq.s32.totalorder %s15, 1
      %p75 = scmp.ne.s32.totalorder %s70, %s72
      %p76 = scmp.eq.s32.totalorder %s15, 0
      %p77 = por %p75, %p76
      %p78 = scmp.ne.s32.totalorder %s70, %s72
      %p79 = scmp.eq.s32.totalorder %s20, 1
      %p80 = por %p78, %p79
      %p81 = scmp.ne.s32.totalorder %s72, %s73
      %p82 = scmp.eq.s32.totalorder %s20, 0
      %p83 = por %p81, %p82
      %p84 = scmp.ne.s32.totalorder %s72, %s73
      %p85 = scmp.eq.s32.totalorder %s21, 1
      %p86 = por %p84, %p85
      %p88 = scmp.ne.s32.totalorder %s73, %s87
      %p89 = scmp.eq.s32.totalorder %s21, 0
      %p90 = por %p88, %p89
      %s92 = sadd.s32 %s91, 1
      %p95 = scmp.eq.s32.totalorder %s15, 1
      %p96 = scmp.ne.s32.totalorder %s91, %s93
      %p97 = scmp.eq.s32.totalorder %s15, 0
      %p98 = por %p96, %p97
      %p99 = scmp.ne.s32.totalorder %s91, %s93
      %p100 = scmp.eq.s32.totalorder %s20, 1
      %p101 = por %p99, %p100
      %p102 = scmp.ne.s32.totalorder %s93, %s94
      %p103 = scmp.eq.s32.totalorder %s20, 0
      %p104 = por %p102, %p103
      %p105 = scmp.ne.s32.totalorder %s93, %s94
      %p106 = scmp.eq.s32.totalorder %s21, 1
      %p107 = por %p105, %p106
      %p109 = scmp.ne.s32.totalorder %s94, %s108
      %p110 = scmp.eq.s32.totalorder %s21, 0
      %p111 = por %p109, %p110
      %s113 = sadd.s32 %s112, 1
      %p116 = scmp.eq.s32.totalorder %s15, 1
      %p117 = scmp.ne.s32.totalorder %s112, %s114
      %p118 = scmp.eq.s32.totalorder %s15, 0
      %p119 = por %p117, %p118
      %p120 = scmp.ne.s32.totalorder %s112, %s114
      %p121 = scmp.eq.s32.totalorder %s20, 1
      %p122 = por %p120, %p121
      %p123 = scmp.ne.s32.totalorder %s114, %s115
      %p124 = scmp.eq.s32.totalorder %s20, 0
      %p125 = por %p123, %p124
      %p126 = scmp.ne.s32.totalorder %s114, %s115
      %p127 = scmp.eq.s32.totalorder %s21, 1
      %p128 = por %p126, %p127
      %p130 = scmp.ne.s32.totalorder %s115, %s129
      %p131 = scmp.eq.s32.totalorder %s21, 0
      %p132 = por %p130, %p131
      %s134 = sadd.s32 %s133, 1
      %p137 = scmp.eq.s32.totalorder %s15, 1
      %p138 = scmp.ne.s32.totalorder %s133, %s135
      %p139 = scmp.eq.s32.totalorder %s15, 0
      %p140 = por %p138, %p139
      %p141 = scmp.ne.s32.totalorder %s133, %s135
      %p142 = scmp.eq.s32.totalorder %s20, 1
      %p143 = por %p141, %p142
      %p144 = scmp.ne.s32.totalorder %s135, %s136
      %p145 = scmp.eq.s32.totalorder %s20, 0
      %p146 = por %p144, %p145
      %p147 = scmp.ne.s32.totalorder %s135, %s136
      %p148 = scmp.eq.s32.totalorder %s21, 1
      %p149 = por %p147, %p148
      %p151 = scmp.ne.s32.totalorder %s136, %s150
      %p152 = scmp.eq.s32.totalorder %s21, 0
      %p153 = por %p151, %p152
      %s154 = ssub.s32 %s15, %s22
      %p155 = scmp.eq.s32.totalorder %s154, 0
      %s157 = sadd.s32 %s156, 1
      %s158 = scalar_select %p155, %s156, %s157
      %p161 = pneg %p155
      %p162 = scmp.eq.s32.totalorder %s15, 1
      %p163 = por %p161, %p162
      %p164 = scmp.ne.s32.totalorder %s156, %s159
      %p165 = scmp.eq.s32.totalorder %s15, 0
      %p166 = por %p164, %p165
      %p167 = scmp.ne.s32.totalorder %s156, %s159
      %p168 = scmp.eq.s32.totalorder %s20, 1
      %p169 = por %p167, %p168
      %p170 = scmp.ne.s32.totalorder %s159, %s160
      %p171 = scmp.eq.s32.totalorder %s20, 0
      %p172 = por %p170, %p171
      %p173 = scmp.ne.s32.totalorder %s159, %s160
      %p174 = scmp.eq.s32.totalorder %s21, 1
      %p175 = por %p173, %p174
      %p177 = scmp.ne.s32.totalorder %s160, %s176
      %p178 = scmp.eq.s32.totalorder %s21, 0
      %p179 = por %p177, %p178
      %p180 = scmp.le.s32.totalorder 1, %s15
      %p181 = scmp.lt.s32.totalorder %s15, 3
      %p182 = pnand %p180, %p181
      %p183 = pneg %p182
      // Predicated region
      $region9: #{tpu_custom_call.1} parent=5 // pred_check
        _
      $region10: #{tpu_custom_call.1} parent=5 // pred_check_branch
        %185 = sbr.rel (%p182) target = $region12
      $region11: #{tpu_custom_call.1} parent=5 // pred_region
        %s186 = ssub.s32 %s15, 1
        // Predicated region
        $region13: #{tpu_custom_call.1} parent=11 // pred_check
          %p187 = pneg %p62
        $region14: #{tpu_custom_call.1} parent=11 // pred_check_branch
          %189 = sbr.rel (%p187) target = $region16
        $region15: #{tpu_custom_call.1} parent=11 // pred_region
          _
        $region16: #{tpu_custom_call.1} parent=11 // pred_fallthru
          _
        // Predicated region
        $region17: #{tpu_custom_call.1} parent=11 // pred_check
          %p190 = pneg %p83
        $region18: #{tpu_custom_call.1} parent=11 // pred_check_branch
          %192 = sbr.rel (%p190) target = $region20
        $region19: #{tpu_custom_call.1} parent=11 // pred_region
          _
        $region20: #{tpu_custom_call.1} parent=11 // pred_fallthru
          _
        // Predicated region
        $region21: #{tpu_custom_call.1} parent=11 // pred_check
          %p193 = pneg %p104
        $region22: #{tpu_custom_call.1} parent=11 // pred_check_branch
          %195 = sbr.rel (%p193) target = $region24
        $region23: #{tpu_custom_call.1} parent=11 // pred_region
          _
        $region24: #{tpu_custom_call.1} parent=11 // pred_fallthru
          _
        // Predicated region
        $region25: #{tpu_custom_call.1} parent=11 // pred_check
          %p196 = pneg %p125
        $region26: #{tpu_custom_call.1} parent=11 // pred_check_branch
          %198 = sbr.rel (%p196) target = $region28
        $region27: #{tpu_custom_call.1} parent=11 // pred_region
          _
        $region28: #{tpu_custom_call.1} parent=11 // pred_fallthru
          _
        // Predicated region
        $region29: #{tpu_custom_call.1} parent=11 // pred_check
          %p199 = pneg %p146
        $region30: #{tpu_custom_call.1} parent=11 // pred_check_branch
          %201 = sbr.rel (%p199) target = $region32
        $region31: #{tpu_custom_call.1} parent=11 // pred_region
          _
        $region32: #{tpu_custom_call.1} parent=11 // pred_fallthru
          _
      $region12: #{tpu_custom_call.1} parent=5 // pred_fallthru
        _
      %p202 = scmp.lt.s32.totalorder %s15, 2
      // Predicated region
      $region33: #{tpu_custom_call.1} parent=5 // pred_check
        %p203 = pneg %p202
      $region34: #{tpu_custom_call.1} parent=5 // pred_check_branch
        %205 = sbr.rel (%p203) target = $region36
      $region35: #{tpu_custom_call.1} parent=5 // pred_region
        // Predicated region
        $region37: #{tpu_custom_call.1} parent=35 // pred_check
          %p206 = pneg %p35
        $region38: #{tpu_custom_call.1} parent=35 // pred_check_branch
          %208 = sbr.rel (%p206) target = $region40
        $region39: #{tpu_custom_call.1} parent=35 // pred_region
          %p209 = scmp.lt.s32.totalorder %s15, 1
          %s210 = scalar_select %p209, %s15, 1
          %s211 = smul.addr %s210, 4
          %s212 = smul.addr %s211, 8
          %s213 = scalar_lea.vmem %s0, %s212
        $region40: #{tpu_custom_call.1} parent=35 // pred_fallthru
          _
      $region36: #{tpu_custom_call.1} parent=5 // pred_fallthru
        _
      %p214 = scmp.le.s32.totalorder 1, %s15
      %p215 = scmp.lt.s32.totalorder %s15, 3
      %p216 = pnand %p214, %p215
      %p217 = pneg %p216
      // Predicated region
      $region41: #{tpu_custom_call.1} parent=5 // pred_check
        _
      $region42: #{tpu_custom_call.1} parent=5 // pred_check_branch
        %219 = sbr.rel (%p216) target = $region44
      $region43: #{tpu_custom_call.1} parent=5 // pred_region
        %s220 = ssub.s32 %s15, 1
        %p221 = scmp.lt.s32.totalorder %s20, 1
        %s222 = scalar_select %p221, %s20, 1
        %s223 = smul.addr %s222, 4
        %s224 = smul.addr %s223, 8
        %s225 = scalar_lea.vmem %s0, %s224
        %p226 = pneg %p41
        %p227 = pneg %p38
        %p228 = pneg %p62
        %p229 = pneg %p59
        %p230 = pneg %p83
        %p231 = pneg %p80
        %p232 = pneg %p104
        %p233 = pneg %p101
        %p234 = pneg %p125
        %p235 = pneg %p122
        %p236 = pneg %p146
        %p237 = pneg %p143
        %p238 = pneg %p172
        %p239 = pneg %p169
        %s240 = sand.u32 %s159, 1
        %s241 = scalar_lea.sflag [#allocation3], %s240
        %s242 = sand.u32 %s159, 1
        %s243 = smul.addr %s242, 32
        %s244 = scalar_lea.vmem [#allocation2], %s243
        %p245 = scmp.lt.s32.totalorder %s20, 1
        %s246 = scalar_select %p245, %s20, 1
        %s247 = smul.addr %s246, 4
        %s248 = smul.addr %s247, 8
        %s249 = scalar_lea.vmem %s0, %s248
        %v250 = vld [vmem:[%s1] sm:$0xff]
        %v251 = vld [vmem:[%s1 + $0x8] sm:$0xff]
        %v252 = vld [vmem:[%s1 + $0x10] sm:$0xff]
        %v253 = vld [vmem:[%s1 + $0x18] sm:$0xff]
        %v254 = vld [vmem:[%s1 + $0x20] sm:$0xff]
        %v255 = vld [vmem:[%s1 + $0x28] sm:$0xff]
        %v256 = vld [vmem:[%s1 + $0x30] sm:$0xff]
        %v257 = vld [vmem:[%s1 + $0x38] sm:$0xff]
        %v258 = vld [vmem:[%s1 + $0x40] sm:$0xff]
        %v259 = vld [vmem:[%s1 + $0x48] sm:$0xff]
        %v260 = vld [vmem:[%s1 + $0x50] sm:$0xff]
        %v261 = vld [vmem:[%s1 + $0x58] sm:$0xff]
        %v262 = vld [vmem:[%s1 + $0x60] sm:$0xff]
        %v263 = vld [vmem:[%s1 + $0x68] sm:$0xff]
        %v264 = vld [vmem:[%s1 + $0x70] sm:$0xff]
        %v265 = vld [vmem:[%s1 + $0x78] sm:$0xff]
        %v266 = vld [vmem:[%s1 + $0x80] sm:$0xff]
        %v267 = vld [vmem:[%s1 + $0x88] sm:$0xff]
        %v268 = vld [vmem:[%s1 + $0x90] sm:$0xff]
        %v269 = vld [vmem:[%s1 + $0x98] sm:$0xff]
        %v270 = vld [vmem:[%s1 + $0xa0] sm:$0xff]
        %v271 = vld [vmem:[%s1 + $0xa8] sm:$0xff]
        %v272 = vld [vmem:[%s1 + $0xb0] sm:$0xff]
        %v273 = vld [vmem:[%s1 + $0xb8] sm:$0xff]
        %v274 = vld [vmem:[%s1 + $0xc0] sm:$0xff]
        %v275 = vld [vmem:[%s1 + $0xc8] sm:$0xff]
        %v276 = vld [vmem:[%s1 + $0xd0] sm:$0xff]
        %v277 = vld [vmem:[%s1 + $0xd8] sm:$0xff]
        %v278 = vld [vmem:[%s1 + $0xe0] sm:$0xff]
        %v279 = vld [vmem:[%s1 + $0xe8] sm:$0xff]
        %v280 = vld [vmem:[%s1 + $0xf0] sm:$0xff]
        %v281 = vld [vmem:[%s1 + $0xf8] sm:$0xff]
        %v282 = vld [vmem:[%s249] sm:$0xff]
        %v283 = vld [vmem:[%s249 + $0x8] sm:$0xff]
        %v284 = vld [vmem:[%s249 + $0x10] sm:$0xff]
        %v285 = vld [vmem:[%s249 + $0x18] sm:$0xff]
        %286 = vmatprep.subr.mxu0 0.0
        %287 = vmatpush1.msra.mxu0 %v265
        %288 = vmatprep.subr.mxu0 0.0
        %289 = vmatpush1.msra.mxu0 %v264
        %290 = vmatprep.subr.mxu0 0.0
        %291 = vmatpush1.msra.mxu0 %v263
        %292 = vmatprep.subr.mxu0 0.0
        %293 = vmatpush1.msra.mxu0 %v262
        %294 = vmatprep.subr.mxu0 0.0
        %295 = vmatpush1.msra.mxu0 %v261
        %296 = vmatprep.subr.mxu0 0.0
        %297 = vmatpush1.msra.mxu0 %v260
        %298 = vmatprep.subr.mxu0 0.0
        %299 = vmatpush1.msra.mxu0 %v259
        %300 = vmatprep.subr.mxu0 0.0
        %301 = vmatpush1.msra.mxu0 %v258
        %302 = vmatprep.subr.mxu0 0.0
        %303 = vmatpush1.msra.mxu0 %v257
        %304 = vmatprep.subr.mxu0 0.0
        %305 = vmatpush1.msra.mxu0 %v256
        %306 = vmatprep.subr.mxu0 0.0
        %307 = vmatpush1.msra.mxu0 %v255
        %308 = vmatprep.subr.mxu0 0.0
        %309 = vmatpush1.msra.mxu0 %v254
        %310 = vmatprep.subr.mxu0 0.0
        %311 = vmatpush1.msra.mxu0 %v253
        %312 = vmatprep.subr.mxu0 0.0
        %313 = vmatpush1.msra.mxu0 %v252
        %314 = vmatprep.subr.mxu0 0.0
        %315 = vmatpush1.msra.mxu0 %v251
        %316 = vmatprep.subr.mxu0 0.0
        %317 = vmatpush1.msra.mxu0 %v250
        %318 = vmatprep.subr.mxu0 0.0
        %319 = vmatpush2.msra.mxu0 %v281
        %320 = vmatprep.subr.mxu0 0.0
        %321 = vmatpush2.msra.mxu0 %v280
        %322 = vmatprep.subr.mxu0 0.0
        %323 = vmatpush2.msra.mxu0 %v279
        %324 = vmatprep.subr.mxu0 0.0
        %325 = vmatpush2.msra.mxu0 %v278
        %326 = vmatprep.subr.mxu0 0.0
        %327 = vmatpush2.msra.mxu0 %v277
        %328 = vmatprep.subr.mxu0 0.0
        %329 = vmatpush2.msra.mxu0 %v276
        %330 = vmatprep.subr.mxu0 0.0
        %331 = vmatpush2.msra.mxu0 %v275
        %332 = vmatprep.subr.mxu0 0.0
        %333 = vmatpush2.msra.mxu0 %v274
        %334 = vmatprep.subr.mxu0 0.0
        %335 = vmatpush2.msra.mxu0 %v273
        %336 = vmatprep.subr.mxu0 0.0
        %337 = vmatpush2.msra.mxu0 %v272
        %338 = vmatprep.subr.mxu0 0.0
        %339 = vmatpush2.msra.mxu0 %v271
        %340 = vmatprep.subr.mxu0 0.0
        %341 = vmatpush2.msra.mxu0 %v270
        %342 = vmatprep.subr.mxu0 0.0
        %343 = vmatpush2.msra.mxu0 %v269
        %344 = vmatprep.subr.mxu0 0.0
        %345 = vmatpush2.msra.mxu0 %v268
        %346 = vmatprep.subr.mxu0 0.0
        %347 = vmatpush2.msra.mxu0 %v267
        %348 = vmatprep.subr.mxu0 0.0
        %349 = vmatpush2.msra.mxu0 %v266
        %350 = vmatprep.mubr.f32.mxu0 %v283
        %351 = vmatmul.mubr.f32.gmra.mxu0 %v282
        %v352 = vpop.f32.mrf.mxu0
        %v353 = vadd.f32 0.0, %v352
        %v354 = vpop.f32.mrf.mxu0
        %355 = vmatprep.mubr.f32.mxu0 %v285
        %356 = vmatmul.mubr.f32.gmra.mxu0 %v284
        %v357 = vpop.f32.mrf.mxu0
        %v358 = vadd.f32 0.0, %v357
        %v359 = vpop.f32.mrf.mxu0
        %360 = vdwg.mxu0
        %v361 = vld [vmem:[%s2] sm:$0xf]
        %v362 = vld [vmem:[%s3] sm:$0xf]
        %vm363 = vcmask 130048
        %v365 = vsel %vm363, %v361, 0
        %367 = vmatprep.subr.mxu0 0.0
        %368 = vmatpush1.msra.mxu0 0.0
        %369 = vmatprep.subr.mxu0 0.0
        %370 = vmatpush1.msra.mxu0 0.0
        %371 = vmatprep.subr.mxu0 0.0
        %372 = vmatpush1.msra.mxu0 0.0
        %373 = vmatprep.subr.mxu0 0.0
        %374 = vmatpush1.msra.mxu0 0.0
        %375 = vmatprep.subr.mxu0 0.0
        %376 = vmatpush1.msra.mxu0 0.0
        %377 = vmatprep.subr.mxu0 0.0
        %378 = vmatpush1.msra.mxu0 0.0
        %379 = vmatprep.subr.mxu0 0.0
        %380 = vmatpush1.msra.mxu0 0.0
        %381 = vmatprep.subr.mxu0 0.0
        %382 = vmatpush1.msra.mxu0 0.0
        %383 = vmatprep.subr.mxu0 0.0
        %384 = vmatpush1.msra.mxu0 0.0
        %385 = vmatprep.subr.mxu0 0.0
        %386 = vmatpush1.msra.mxu0 0.0
        %387 = vmatprep.subr.mxu0 0.0
        %388 = vmatpush1.msra.mxu0 0.0
        %389 = vmatprep.subr.mxu0 0.0
        %390 = vmatpush1.msra.mxu0 0.0
        %391 = vmatprep.subr.mxu0 0.0
        %392 = vmatpush1.msra.mxu0 0.0
        %393 = vmatprep.subr.mxu0 0.0
        %394 = vmatpush1.msra.mxu0 0.0
        %395 = vmatprep.subr.mxu0 0.0
        %396 = vmatpush1.msra.mxu0 %v358
        %397 = vmatprep.subr.mxu0 0.0
        %398 = vmatpush1.msra.mxu0 %v353
        %399 = vmatprep.subr.mxu0 0.0
        %400 = vmatpush2.msra.mxu0 0.0
        %401 = vmatprep.subr.mxu0 0.0
        %402 = vmatpush2.msra.mxu0 0.0
        %403 = vmatprep.subr.mxu0 0.0
        %404 = vmatpush2.msra.mxu0 0.0
        %405 = vmatprep.subr.mxu0 0.0
        %406 = vmatpush2.msra.mxu0 0.0
        %407 = vmatprep.subr.mxu0 0.0
        %408 = vmatpush2.msra.mxu0 0.0
        %409 = vmatprep.subr.mxu0 0.0
        %410 = vmatpush2.msra.mxu0 0.0
        %411 = vmatprep.subr.mxu0 0.0
        %412 = vmatpush2.msra.mxu0 0.0
        %413 = vmatprep.subr.mxu0 0.0
        %414 = vmatpush2.msra.mxu0 0.0
        %415 = vmatprep.subr.mxu0 0.0
        %416 = vmatpush2.msra.mxu0 0.0
        %417 = vmatprep.subr.mxu0 0.0
        %418 = vmatpush2.msra.mxu0 0.0
        %419 = vmatprep.subr.mxu0 0.0
        %420 = vmatpush2.msra.mxu0 0.0
        %421 = vmatprep.subr.mxu0 0.0
        %422 = vmatpush2.msra.mxu0 0.0
        %423 = vmatprep.subr.mxu0 0.0
        %424 = vmatpush2.msra.mxu0 0.0
        %425 = vmatprep.subr.mxu0 0.0
        %426 = vmatpush2.msra.mxu0 0.0
        %427 = vmatprep.subr.mxu0 0.0
        %428 = vmatpush2.msra.mxu0 0.0
        %429 = vmatprep.subr.mxu0 0.0
        %430 = vmatpush2.msra.mxu0 0.0
        %431 = vmatprep.mubr.f32.mxu0 0.0
        %432 = vmatmul.mubr.f32.gmra.mxu0 %v365
        %v433 = vpop.f32.mrf.mxu0
        %v434 = vadd.f32 %v362, %v433
        %v435 = vpop.f32.mrf.mxu0
        %436 = vdwg.mxu0
        %v437 = vmax.f32 %v434, 0.0
        %v438 = vld [vmem:[%s4] sm:$0xff]
        %v439 = vld [vmem:[%s4 + $0x8] sm:$0xff]
        %v440 = vld [vmem:[%s4 + $0x10] sm:$0xff]
        %v441 = vld [vmem:[%s4 + $0x18] sm:$0xff]
        %v442 = vld [vmem:[%s4 + $0x20] sm:$0xff]
        %v443 = vld [vmem:[%s4 + $0x28] sm:$0xff]
        %v444 = vld [vmem:[%s4 + $0x30] sm:$0xff]
        %v445 = vld [vmem:[%s4 + $0x38] sm:$0xff]
        %v446 = vld [vmem:[%s5] sm:$0xff]
        %v447 = vld [vmem:[%s5 + $0x8] sm:$0xff]
        %v448 = vld [vmem:[%s5 + $0x10] sm:$0xff]
        %v449 = vld [vmem:[%s5 + $0x18] sm:$0xff]
        %v450 = vld [vmem:[%s5 + $0x20] sm:$0xff]
        %v451 = vld [vmem:[%s5 + $0x28] sm:$0xff]
        %v452 = vld [vmem:[%s5 + $0x30] sm:$0xff]
        %v453 = vld [vmem:[%s5 + $0x38] sm:$0xff]
        %vm454 = vcmask 31744
        %v456 = vsel %vm454, %v438, 0
        %v459 = vsel %vm454, %v439, 0
        %v462 = vsel %vm454, %v440, 0
        %v465 = vsel %vm454, %v441, 0
        %v468 = vsel %vm454, %v442, 0
        %v471 = vsel %vm454, %v443, 0
        %v474 = vsel %vm454, %v444, 0
        %v477 = vsel %vm454, %v445, 0
        %vm479 = vcmask 1043456
        %v481 = vsel %vm479, %v437, 0
        %483 = vmatprep.subr.mxu0 0.0
        %484 = vmatpush1.msra.mxu0 0.0
        %485 = vmatprep.subr.mxu0 0.0
        %486 = vmatpush1.msra.mxu0 0.0
        %487 = vmatprep.subr.mxu0 0.0
        %488 = vmatpush1.msra.mxu0 0.0
        %489 = vmatprep.subr.mxu0 0.0
        %490 = vmatpush1.msra.mxu0 0.0
        %491 = vmatprep.subr.mxu0 0.0
        %492 = vmatpush1.msra.mxu0 0.0
        %493 = vmatprep.subr.mxu0 0.0
        %494 = vmatpush1.msra.mxu0 0.0
        %495 = vmatprep.subr.mxu0 0.0
        %496 = vmatpush1.msra.mxu0 0.0
        %497 = vmatprep.subr.mxu0 0.0
        %498 = vmatpush1.msra.mxu0 0.0
        %499 = vmatprep.subr.mxu0 0.0
        %500 = vmatpush1.msra.mxu0 0.0
        %501 = vmatprep.subr.mxu0 0.0
        %502 = vmatpush1.msra.mxu0 0.0
        %503 = vmatprep.subr.mxu0 0.0
        %504 = vmatpush1.msra.mxu0 0.0
        %505 = vmatprep.subr.mxu0 0.0
        %506 = vmatpush1.msra.mxu0 0.0
        %507 = vmatprep.subr.mxu0 0.0
        %508 = vmatpush1.msra.mxu0 0.0
        %509 = vmatprep.subr.mxu0 0.0
        %510 = vmatpush1.msra.mxu0 0.0
        %511 = vmatprep.subr.mxu0 0.0
        %512 = vmatpush1.msra.mxu0 0.0
        %513 = vmatprep.subr.mxu0 0.0
        %514 = vmatpush1.msra.mxu0 %v481
        %515 = vmatprep.subr.mxu0 0.0
        %516 = vmatpush2.msra.mxu0 0.0
        %517 = vmatprep.subr.mxu0 0.0
        %518 = vmatpush2.msra.mxu0 0.0
        %519 = vmatprep.subr.mxu0 0.0
        %520 = vmatpush2.msra.mxu0 0.0
        %521 = vmatprep.subr.mxu0 0.0
        %522 = vmatpush2.msra.mxu0 0.0
        %523 = vmatprep.subr.mxu0 0.0
        %524 = vmatpush2.msra.mxu0 0.0
        %525 = vmatprep.subr.mxu0 0.0
        %526 = vmatpush2.msra.mxu0 0.0
        %527 = vmatprep.subr.mxu0 0.0
        %528 = vmatpush2.msra.mxu0 0.0
        %529 = vmatprep.subr.mxu0 0.0
        %530 = vmatpush2.msra.mxu0 0.0
        %531 = vmatprep.subr.mxu0 0.0
        %532 = vmatpush2.msra.mxu0 0.0
        %533 = vmatprep.subr.mxu0 0.0
        %534 = vmatpush2.msra.mxu0 0.0
        %535 = vmatprep.subr.mxu0 0.0
        %536 = vmatpush2.msra.mxu0 0.0
        %537 = vmatprep.subr.mxu0 0.0
        %538 = vmatpush2.msra.mxu0 0.0
        %539 = vmatprep.subr.mxu0 0.0
        %540 = vmatpush2.msra.mxu0 0.0
        %541 = vmatprep.subr.mxu0 0.0
        %542 = vmatpush2.msra.mxu0 0.0
        %543 = vmatprep.subr.mxu0 0.0
        %544 = vmatpush2.msra.mxu0 0.0
        %545 = vmatprep.subr.mxu0 0.0
        %546 = vmatpush2.msra.mxu0 0.0
        %547 = vmatprep.mubr.f32.mxu0 0.0
        %548 = vmatmul.mubr.f32.gmra.mxu0 %v456
        %v549 = vpop.f32.mrf.mxu0
        %v550 = vadd.f32 %v446, %v549
        %v551 = vpop.f32.mrf.mxu0
        %552 = vmatprep.mubr.f32.mxu0 0.0
        %553 = vmatmul.mubr.f32.gmra.mxu0 %v459
        %v554 = vpop.f32.mrf.mxu0
        %v555 = vadd.f32 %v447, %v554
        %v556 = vpop.f32.mrf.mxu0
        %557 = vmatprep.mubr.f32.mxu0 0.0
        %558 = vmatmul.mubr.f32.gmra.mxu0 %v462
        %v559 = vpop.f32.mrf.mxu0
        %v560 = vadd.f32 %v448, %v559
        %v561 = vpop.f32.mrf.mxu0
        %562 = vmatprep.mubr.f32.mxu0 0.0
        %563 = vmatmul.mubr.f32.gmra.mxu0 %v465
        %v564 = vpop.f32.mrf.mxu0
        %v565 = vadd.f32 %v449, %v564
        %v566 = vpop.f32.mrf.mxu0
        %567 = vmatprep.mubr.f32.mxu0 0.0
        %568 = vmatmul.mubr.f32.gmra.mxu0 %v468
        %v569 = vpop.f32.mrf.mxu0
        %v570 = vadd.f32 %v450, %v569
        %v571 = vpop.f32.mrf.mxu0
        %572 = vmatprep.mubr.f32.mxu0 0.0
        %573 = vmatmul.mubr.f32.gmra.mxu0 %v471
        %v574 = vpop.f32.mrf.mxu0
        %v575 = vadd.f32 %v451, %v574
        %v576 = vpop.f32.mrf.mxu0
        %577 = vmatprep.mubr.f32.mxu0 0.0
        %578 = vmatmul.mubr.f32.gmra.mxu0 %v474
        %v579 = vpop.f32.mrf.mxu0
        %v580 = vadd.f32 %v452, %v579
        %v581 = vpop.f32.mrf.mxu0
        %582 = vmatprep.mubr.f32.mxu0 0.0
        %583 = vmatmul.mubr.f32.gmra.mxu0 %v477
        %v584 = vpop.f32.mrf.mxu0
        %v585 = vadd.f32 %v453, %v584
        %v586 = vpop.f32.mrf.mxu0
        %587 = vdwg.mxu0
        %v588 = vadd.f32 %v550, 3.0
        %v589 = vadd.f32 %v555, 3.0
        %v590 = vadd.f32 %v560, 3.0
        %v591 = vadd.f32 %v565, 3.0
        %v592 = vadd.f32 %v570, 3.0
        %v593 = vadd.f32 %v575, 3.0
        %v594 = vadd.f32 %v580, 3.0
        %v595 = vadd.f32 %v585, 3.0
        %v596 = vmul.f32 %v588, 0.16666667
        %v597 = vmul.f32 %v589, 0.16666667
        %v598 = vmul.f32 %v590, 0.16666667
        %v599 = vmul.f32 %v591, 0.16666667
        %v600 = vmul.f32 %v592, 0.16666667
        %v601 = vmul.f32 %v593, 0.16666667
        %v602 = vmul.f32 %v594, 0.16666667
        %v603 = vmul.f32 %v595, 0.16666667
        %v604 = vmax.f32 %v596, 0.0
        %v605 = vmax.f32 %v597, 0.0
        %v606 = vmax.f32 %v598, 0.0
        %v607 = vmax.f32 %v599, 0.0
        %v608 = vmax.f32 %v600, 0.0
        %v609 = vmax.f32 %v601, 0.0
        %v610 = vmax.f32 %v602, 0.0
        %v611 = vmax.f32 %v603, 0.0
        %v612 = vmin.f32 %v604, 1.0
        %v613 = vmin.f32 %v605, 1.0
        %v614 = vmin.f32 %v606, 1.0
        %v615 = vmin.f32 %v607, 1.0
        %v616 = vmin.f32 %v608, 1.0
        %v617 = vmin.f32 %v609, 1.0
        %v618 = vmin.f32 %v610, 1.0
        %v619 = vmin.f32 %v611, 1.0
        %v620 = vsub.f32 %v612, 0.5
        %v621 = vsub.f32 %v613, 0.5
        %v622 = vmul.f32 %v620, 2.0
        %v623 = vmul.f32 %v621, 2.0
        %v624 = vadd.f32 %v622, 1.0
        %v625 = vadd.f32 %v623, 1.0
        %v626 = vsub.f32 %v614, 0.5
        %v627 = vsub.f32 %v615, 0.5
        %v628 = vsub.f32 %v616, 0.5
        %v629 = vsub.f32 %v617, 0.5
        %v630 = vmul.f32 %v628, 2.0
        %v631 = vmul.f32 %v629, 2.0
        %v632 = vsub.f32 %v618, 0.5
        %v633 = vsub.f32 %v619, 0.5
        %635 = vset.pattern.permute.xlu0 0
        %636 = vperm.xlu0 %635, %v624
        %v637 = vpop.permute.xlu0 %636
        %640 = vset.pattern.permute.xlu0 0
        %641 = vperm.xlu0 %640, %v625
        %v642 = vpop.permute.xlu0 %641
        %v644 = vmul.f32 %v282, %v637
        %v645 = vmul.f32 %v283, %v637
        %v646 = vmul.f32 %v284, %v642
        %v647 = vmul.f32 %v285, %v642
        %649 = vset.pattern.permute.xlu0 0
        %650 = vperm.xlu0 %649, %v626
        %v651 = vpop.permute.xlu0 %650
        %654 = vset.pattern.permute.xlu0 0
        %655 = vperm.xlu0 %654, %v627
        %v656 = vpop.permute.xlu0 %655
        %v658 = vadd.f32 %v644, %v651
        %v659 = vadd.f32 %v645, %v651
        %v660 = vadd.f32 %v646, %v656
        %v661 = vadd.f32 %v647, %v656
        %663 = vset.pattern.permute.xlu0 0
        %664 = vperm.xlu0 %663, %v630
        %v665 = vpop.permute.xlu0 %664
        %668 = vset.pattern.permute.xlu0 0
        %669 = vperm.xlu0 %668, %v631
        %v670 = vpop.permute.xlu0 %669
        %v672 = vmul.f32 %v282, %v665
        %v673 = vmul.f32 %v283, %v665
        %v674 = vmul.f32 %v284, %v670
        %v675 = vmul.f32 %v285, %v670
        %677 = vset.pattern.permute.xlu0 0
        %678 = vperm.xlu0 %677, %v632
        %v679 = vpop.permute.xlu0 %678
        %682 = vset.pattern.permute.xlu0 0
        %683 = vperm.xlu0 %682, %v633
        %v684 = vpop.permute.xlu0 %683
        %v686 = vadd.f32 %v672, %v679
        %v687 = vadd.f32 %v673, %v679
        %v688 = vadd.f32 %v674, %v684
        %v689 = vadd.f32 %v675, %v684
        %v690 = vmax.f32 %v658, %v686
        %v691 = vmax.f32 %v659, %v687
        %v692 = vmax.f32 %v660, %v688
        %v693 = vmax.f32 %v661, %v689
        %694 = vst [vmem:[%s244] sm:$0xff] %v690
        %695 = vst [vmem:[%s244 + $0x8] sm:$0xff] %v691
        %696 = vst [vmem:[%s244 + $0x10] sm:$0xff] %v692
        %697 = vst [vmem:[%s244 + $0x18] sm:$0xff] %v693
        %s698 = sand.u32 %s159, 1
        %s699 = scalar_lea.sflag [#allocation3], %s698
        %s700 = sand.u32 %s159, 1
        %s701 = smul.addr %s700, 32
        %s702 = scalar_lea.vmem [#allocation2], %s701
        // Predicated region
        $region45: #{tpu_custom_call.1} parent=43 // pred_check
          %p703 = pneg %p169
        $region46: #{tpu_custom_call.1} parent=43 // pred_check_branch
          %705 = sbr.rel (%p703) target = $region48
        $region47: #{tpu_custom_call.1} parent=43 // pred_region
          %s707 = ssub.s32 512, 512
          %708 = vsyncadd %s699, %s707
          %s709 = smul.addr %s20, 4
          %s710 = smul.addr %s709, 128
          %s711 = scalar_lea.hbm %s6, %s710
          %s712 = sshll.u32 %s702, 4
          %s713 = int_to_ptr.vmem [resolvable:$true] %s712
          %718 = dma.vmem_to_hbm [thread:$0]  %s713, 512, %s711, %s699, 256, 256, 16
        $region48: #{tpu_custom_call.1} parent=43 // pred_fallthru
          _
      $region44: #{tpu_custom_call.1} parent=5 // pred_fallthru
        _
      %p719 = scmp.le.s32.totalorder 2, %s15
      // Predicated region
      $region49: #{tpu_custom_call.1} parent=5 // pred_check
        %p720 = pneg %p719
      $region50: #{tpu_custom_call.1} parent=5 // pred_check_branch
        %722 = sbr.rel (%p720) target = $region52
      $region51: #{tpu_custom_call.1} parent=5 // pred_region
        %s723 = ssub.s32 %s15, 2
        // Predicated region
        $region53: #{tpu_custom_call.1} parent=51 // pred_check
          %p724 = pneg %p175
        $region54: #{tpu_custom_call.1} parent=51 // pred_check_branch
          %726 = sbr.rel (%p724) target = $region56
        $region55: #{tpu_custom_call.1} parent=51 // pred_region
          %s727 = sand.u32 %s160, 1
          %s728 = scalar_lea.sflag [#allocation3], %s727
          %s729 = sand.u32 %s160, 1
          %s730 = smul.addr %s729, 32
          %s731 = scalar_lea.vmem [#allocation2], %s730
          %732 = dma.done %s728, 512
        $region56: #{tpu_custom_call.1} parent=51 // pred_fallthru
          _
      $region52: #{tpu_custom_call.1} parent=5 // pred_fallthru
        _
    $region6: #{tpu_custom_call.1} parent=1 // loop_footer
      %s19 = sadd.s32 1, %s15
    $region7: #{tpu_custom_call.1} parent=1 // loop_footer_branch
      %14 = sbr.rel target = $region3
    $region8: #{tpu_custom_call.1} parent=1 // loop_exit
      _
    %733 = vsyncpa [#allocation3], 1
    %s734 = scalar_lea.sflag [#allocation3], 1
    %735 = vsyncpa %s734, 1

</llo_original>
